<compile_context>
chip_gen: v5e
topology: v5e:2x2
jax: 0.10.0
libtpu: 0.0.40
codegen_flags: <defaults>
</compile_context>

<pallas_src>
import functools

import jax
import jax.numpy as jnp
from jax import lax
from jax.experimental import pallas as pl
from jax.experimental.pallas import tpu as pltpu


def _round_up(x, m):
    return ((x + m - 1) // m) * m


def mlp_net_kernel(x_ref, w1_ref, b1_ref, w2_ref, b2_ref, wh_ref, bh_ref,
                   pi_ref, v_ref, *, n_actions):
    # In-kernel f32 -> bf16 cast of the state (VPU work hidden under DMA/MXU;
    # avoids a separate XLA cast pass over HBM in the wrapper).
    x = x_ref[...].astype(w1_ref.dtype)

    # fc1 + relu  (bf16 operands -> f32 accumulate, bias/relu in f32)
    h1 = jnp.dot(x, w1_ref[...], preferred_element_type=jnp.float32) + b1_ref[...]
    h1 = jnp.maximum(h1, 0.0)

    # fc2 + relu
    h2 = jnp.dot(h1.astype(w2_ref.dtype), w2_ref[...],
                 preferred_element_type=jnp.float32) + b2_ref[...]
    h2 = jnp.maximum(h2, 0.0)

    # fused heads: cols [0, n_actions) = policy logits, col n_actions = value,
    # remaining cols are zero padding (zero weights + zero bias) up to 128.
    logits = jnp.dot(h2.astype(wh_ref.dtype), wh_ref[...],
                     preferred_element_type=jnp.float32) + bh_ref[...]

    col = lax.broadcasted_iota(jnp.int32, logits.shape, 1)
    pi_mask = col < n_actions          # real action columns only

    # Masked, numerically-stable softmax over the action columns. Exact divide:
    # the kernel is memory-bound so the divide is free, and it keeps rows
    # normalized to f32 precision before the bf16 store.
    masked_logits = jnp.where(pi_mask, logits, -jnp.inf)
    m = jnp.max(masked_logits, axis=1, keepdims=True)
    e = jnp.where(pi_mask, jnp.exp(logits - m), 0.0)
    denom = jnp.sum(e, axis=1, keepdims=True)
    pi = e / denom

    # Lane-dense bf16 slab for the policy (dominant writeback stream, halved
    # vs f32) + a tiny exact-f32 column for the value head.
    pi_ref[...] = jnp.where(pi_mask, pi, 0.0).astype(pi_ref.dtype)
    v_ref[...] = logits[:, n_actions:n_actions + 1]


def prepare_params(params, compute_dtype=jnp.bfloat16):
    """One-time weight prep (outside the per-step RL call path):
    transpose PyTorch (out, in) -> (in, out), fuse pi/v heads, pad heads to
    128 lanes, cast matmul operands to bf16, keep biases in f32."""
    w1 = params["w1"].T.astype(compute_dtype)                 # (Din, fc1)
    w2 = params["w2"].T.astype(compute_dtype)                 # (fc1, fc2)
    wpi_t = params["wpi"].T.astype(jnp.float32)               # (fc2, n_actions)
    wv_t = params["wv"].T.astype(jnp.float32)                 # (fc2, 1)
    n_actions = wpi_t.shape[1]
    fc2_dims = wpi_t.shape[0]

    head_width = _round_up(n_actions + 1, 128)                # lane-dense output slab
    head_w = jnp.concatenate([wpi_t, wv_t], axis=1)           # (fc2, n_actions+1)
    wh = jnp.zeros((fc2_dims, head_width), jnp.float32)
    wh = wh.at[:, : n_actions + 1].set(head_w).astype(compute_dtype)

    head_b = jnp.concatenate(
        [params["bpi"].reshape(-1), params["bv"].reshape(-1)]).astype(jnp.float32)
    bh = jnp.zeros((1, head_width), jnp.float32).at[0, : n_actions + 1].set(head_b)

    return dict(
        w1=w1, b1=params["b1"].reshape(1, -1).astype(jnp.float32),
        w2=w2, b2=params["b2"].reshape(1, -1).astype(jnp.float32),
        wh=wh, bh=bh,
        n_actions=n_actions, head_width=head_width,
        compute_dtype=compute_dtype,
    )


def _choose_tile(B, tb):
    """Pick batch tile TB (multiple of 8 sublanes) and grid length.

    Small batches -> one grid step (fixed per-step overhead dominates).
    Large batches -> an even number (>=2) of steps so both v7x TensorCores get
    work under dimension_semantics=("parallel",); harmless on v5e/v6e."""
    tb = max(8, _round_up(tb, 8))
    if B <= tb:
        TB = _round_up(B, 8)
    else:
        n_steps = pl.cdiv(B, tb)
        n_steps = 2 * ((n_steps + 1) // 2)          # round up to even
        TB = _round_up(pl.cdiv(B, n_steps), 8)
    return TB, pl.cdiv(B, TB)


def mlp_net_forward(state, prep, *, tb=2048):
    """state: (B, input_dims) f32. prep: output of prepare_params. Returns (pi, v)."""
    B, Din = state.shape
    n_actions = prep["n_actions"]
    head_width = prep["head_width"]

    TB, grid = _choose_tile(B, tb)

    kernel = functools.partial(mlp_net_kernel, n_actions=n_actions)
    const = lambda a: pl.BlockSpec(a.shape, lambda i: (0,) * a.ndim)

    pi_slab, v_col = pl.pallas_call(
        kernel,
        out_shape=(
            jax.ShapeDtypeStruct((B, head_width), jnp.bfloat16),  # [pi | zeros]
            jax.ShapeDtypeStruct((B, 1), jnp.float32),            # value column
        ),
        grid=(grid,),
        in_specs=[
            pl.BlockSpec((TB, Din), lambda i: (i, 0)),   # ragged last tile handled by Pallas
            const(prep["w1"]), const(prep["b1"]),        # weights stay VMEM-resident
            const(prep["w2"]), const(prep["b2"]),
            const(prep["wh"]), const(prep["bh"]),
        ],
        out_specs=(
            pl.BlockSpec((TB, head_width), lambda i: (i, 0)),
            pl.BlockSpec((TB, 1), lambda i: (i, 0)),
        ),
        compiler_params=pltpu.CompilerParams(
            dimension_semantics=("parallel",),            # v7x: shard batch across 2 TCs
            vmem_limit_bytes=32 * 1024 * 1024),           # portable headroom (v5e..v7x)
    )(state, prep["w1"], prep["b1"], prep["w2"], prep["b2"],
      prep["wh"], prep["bh"])

    # TODO(synk): downstream consumers could take the (B, head_width) slab
    # directly (or be fused) to avoid these two tiny slice launches at
    # RL-sized batches.
    pi = pi_slab[:, :n_actions].astype(jnp.float32)
    v = v_col
    return pi, v


def init_params(key, input_dims, fc1_dims, fc2_dims, n_actions):
    """Deterministic synthetic init; PyTorch nn.Linear shape conventions (out, in)."""
    ks = jax.random.split(key, 8)

    def lin(kw, kb, fan_in, fan_out):
        bound = 1.0 / jnp.sqrt(fan_in)
        w = jax.random.uniform(kw, (fan_out, fan_in), jnp.float32, -bound, bound)
        b = jax.random.uniform(kb, (fan_out,), jnp.float32, -bound, bound)
        return w, b

    w1, b1 = lin(ks[0], ks[1], input_dims, fc1_dims)
    w2, b2 = lin(ks[2], ks[3], fc1_dims, fc2_dims)
    wv, bv = lin(ks[4], ks[5], fc2_dims, 1)
    wpi, bpi = lin(ks[6], ks[7], fc2_dims, n_actions)
    return dict(w1=w1, b1=b1, w2=w2, b2=b2, wpi=wpi, bpi=bpi, wv=wv, bv=bv)


def _reference(state, params):
    h1 = jnp.maximum(state @ params["w1"].T + params["b1"], 0.0)
    h2 = jnp.maximum(h1 @ params["w2"].T + params["b2"], 0.0)
    pi = jax.nn.softmax(h2 @ params["wpi"].T + params["bpi"], axis=1)
    v = h2 @ params["wv"].T + params["bv"]
    return pi, v


if __name__ == "__main__":
    key = jax.random.PRNGKey(0)
    k_state, k_params, k_state2 = jax.random.split(key, 3)

    B, input_dims, fc1_dims, fc2_dims, n_actions = 8, 16, 32, 32, 4
    params = init_params(k_params, input_dims, fc1_dims, fc2_dims, n_actions)
    prep = prepare_params(params)   # one-time weight prep (fused/padded/bf16)

    # small case (single grid step, typical RL rollout batch)
    state = jax.random.normal(k_state, (B, input_dims), jnp.float32)
    pi, v = mlp_net_forward(state, prep)
    jax.block_until_ready((pi, v))

    pi_ref, v_ref = _reference(state, params)
    assert pi.shape == (B, n_actions) and v.shape == (B, 1)
    # bf16-stored pi: row sums are exact to f32 in-kernel, ~bf16 rounding after store
    assert jnp.allclose(jnp.sum(pi, axis=1), 1.0, atol=5e-3), "pi rows not normalized"
    assert jnp.allclose(pi, pi_ref, atol=2e-2), "pi mismatch"
    assert jnp.allclose(v, v_ref, atol=5e-2), "v mismatch"

    # larger batch exercising the multi-step parallel grid + ragged last tile
    # (tb=128 -> 4 even grid steps of TB=80 rows, last tile 60 rows)
    B2 = 300
    state2 = jax.random.normal(k_state2, (B2, input_dims), jnp.float32)
    pi2, v2 = mlp_net_forward(state2, prep, tb=128)
    jax.block_until_ready((pi2, v2))

    pi2_ref, v2_ref = _reference(state2, params)
    assert pi2.shape == (B2, n_actions) and v2.shape == (B2, 1)
    assert jnp.allclose(pi2, pi2_ref, atol=2e-2), "pi mismatch (gridded)"
    assert jnp.allclose(v2, v2_ref, atol=5e-2), "v mismatch (gridded)"

    print("KERNEL_OK")
</pallas_src>

<mosaic_0001>
module attributes {stable_mosaic.version = 11 : i64} {
  func.func @mlp_net_kernel(%arg0: i32, %arg1: memref<8x16xf32, #tpu.memory_space<vmem>>, %arg2: memref<16x32xbf16, #tpu.memory_space<vmem>>, %arg3: memref<1x32xf32, #tpu.memory_space<vmem>>, %arg4: memref<32x32xbf16, #tpu.memory_space<vmem>>, %arg5: memref<1x32xf32, #tpu.memory_space<vmem>>, %arg6: memref<32x128xbf16, #tpu.memory_space<vmem>>, %arg7: memref<1x128xf32, #tpu.memory_space<vmem>>, %arg8: memref<8x128xbf16, #tpu.memory_space<vmem>>, %arg9: memref<8x1xf32, #tpu.memory_space<vmem>>) attributes {dimension_semantics = [#tpu.dimension_semantics<parallel>], iteration_bounds = array<i64: 1>, scalar_prefetch = 0 : i64, scratch_operands = 0 : i64, tpu.core_type = #tpu.core_type<tc>, window_params = [{transform_indices = @transform_0, window_bounds = array<i64: 8, 16>}, {pipeline_mode = #tpu.pipeline_mode<synchronous>, transform_indices = @transform_1, window_bounds = array<i64: 16, 32>}, {pipeline_mode = #tpu.pipeline_mode<synchronous>, transform_indices = @transform_2, window_bounds = array<i64: 1, 32>}, {pipeline_mode = #tpu.pipeline_mode<synchronous>, transform_indices = @transform_3, window_bounds = array<i64: 32, 32>}, {pipeline_mode = #tpu.pipeline_mode<synchronous>, transform_indices = @transform_4, window_bounds = array<i64: 1, 32>}, {pipeline_mode = #tpu.pipeline_mode<synchronous>, transform_indices = @transform_5, window_bounds = array<i64: 32, 128>}, {pipeline_mode = #tpu.pipeline_mode<synchronous>, transform_indices = @transform_6, window_bounds = array<i64: 1, 128>}, {transform_indices = @transform_7, window_bounds = array<i64: 8, 128>}, {transform_indices = @transform_8, window_bounds = array<i64: 8, 1>}]} {
    %c0 = arith.constant 0 : index
    %c0_0 = arith.constant 0 : index
    %0 = vector.load %arg1[%c0, %c0_0] : memref<8x16xf32, #tpu.memory_space<vmem>>, vector<8x16xf32>
    %1 = arith.truncf %0 : vector<8x16xf32> to vector<8x16xbf16>
    %c0_1 = arith.constant 0 : index
    %c0_2 = arith.constant 0 : index
    %2 = vector.load %arg2[%c0_1, %c0_2] : memref<16x32xbf16, #tpu.memory_space<vmem>>, vector<16x32xbf16>
    %cst = arith.constant dense<0.000000e+00> : vector<8x32xf32>
    %3 = tpu.matmul %1, %2, %cst {dimension_numbers = #tpu.dot_dimension_numbers<[1], [0], [0], [1], [0, 0, 1, 1], [], []>} : vector<8x16xbf16>, vector<16x32xbf16>, vector<8x32xf32> -> vector<8x32xf32>
    %c0_3 = arith.constant 0 : index
    %c0_4 = arith.constant 0 : index
    %4 = vector.load %arg3[%c0_3, %c0_4] : memref<1x32xf32, #tpu.memory_space<vmem>>, vector<1x32xf32>
    %5 = vector.broadcast %4 : vector<1x32xf32> to vector<8x32xf32>
    %6 = arith.addf %3, %5 : vector<8x32xf32>
    %cst_5 = arith.constant 0.000000e+00 : f32
    %7 = vector.broadcast %cst_5 : f32 to vector<8x32xf32>
    %8 = arith.maximumf %6, %7 : vector<8x32xf32>
    %9 = arith.truncf %8 : vector<8x32xf32> to vector<8x32xbf16>
    %c0_6 = arith.constant 0 : index
    %c0_7 = arith.constant 0 : index
    %10 = vector.load %arg4[%c0_6, %c0_7] : memref<32x32xbf16, #tpu.memory_space<vmem>>, vector<32x32xbf16>
    %cst_8 = arith.constant dense<0.000000e+00> : vector<8x32xf32>
    %11 = tpu.matmul %9, %10, %cst_8 {dimension_numbers = #tpu.dot_dimension_numbers<[1], [0], [0], [1], [0, 0, 1, 1], [], []>} : vector<8x32xbf16>, vector<32x32xbf16>, vector<8x32xf32> -> vector<8x32xf32>
    %c0_9 = arith.constant 0 : index
    %c0_10 = arith.constant 0 : index
    %12 = vector.load %arg5[%c0_9, %c0_10] : memref<1x32xf32, #tpu.memory_space<vmem>>, vector<1x32xf32>
    %13 = vector.broadcast %12 : vector<1x32xf32> to vector<8x32xf32>
    %14 = arith.addf %11, %13 : vector<8x32xf32>
    %cst_11 = arith.constant 0.000000e+00 : f32
    %15 = vector.broadcast %cst_11 : f32 to vector<8x32xf32>
    %16 = arith.maximumf %14, %15 : vector<8x32xf32>
    %17 = arith.truncf %16 : vector<8x32xf32> to vector<8x32xbf16>
    %c0_12 = arith.constant 0 : index
    %c0_13 = arith.constant 0 : index
    %18 = vector.load %arg6[%c0_12, %c0_13] : memref<32x128xbf16, #tpu.memory_space<vmem>>, vector<32x128xbf16>
    %cst_14 = arith.constant dense<0.000000e+00> : vector<8x128xf32>
    %19 = tpu.matmul %17, %18, %cst_14 {dimension_numbers = #tpu.dot_dimension_numbers<[1], [0], [0], [1], [0, 0, 1, 1], [], []>} : vector<8x32xbf16>, vector<32x128xbf16>, vector<8x128xf32> -> vector<8x128xf32>
    %c0_15 = arith.constant 0 : index
    %c0_16 = arith.constant 0 : index
    %20 = vector.load %arg7[%c0_15, %c0_16] : memref<1x128xf32, #tpu.memory_space<vmem>>, vector<1x128xf32>
    %21 = vector.broadcast %20 : vector<1x128xf32> to vector<8x128xf32>
    %22 = arith.addf %19, %21 : vector<8x128xf32>
    %23 = tpu.iota {dimensions = array<i32: 1>} : vector<8x128xi32>
    %c4_i32 = arith.constant 4 : i32
    %24 = vector.broadcast %c4_i32 : i32 to vector<8x128xi32>
    %25 = arith.cmpi slt, %23, %24 : vector<8x128xi32>
    %cst_17 = arith.constant 0xFF800000 : f32
    %26 = vector.broadcast %cst_17 : f32 to vector<8x128xf32>
    %27 = arith.select %25, %22, %26 : vector<8x128xi1>, vector<8x128xf32>
    %cst_18 = arith.constant dense<0xFF800000> : vector<8xf32>
    %28 = vector.multi_reduction <maximumf>, %27, %cst_18 [1] : vector<8x128xf32> to vector<8xf32>
    %29 = vector.shape_cast %28 : vector<8xf32> to vector<8x1xf32>
    %30 = vector.broadcast %29 : vector<8x1xf32> to vector<8x128xf32>
    %31 = arith.subf %22, %30 : vector<8x128xf32>
    %32 = math.exp %31 : vector<8x128xf32>
    %cst_19 = arith.constant 0.000000e+00 : f32
    %33 = vector.broadcast %cst_19 : f32 to vector<8x128xf32>
    %34 = arith.select %25, %32, %33 : vector<8x128xi1>, vector<8x128xf32>
    %cst_20 = arith.constant dense<0.000000e+00> : vector<8xf32>
    %35 = vector.multi_reduction <add>, %34, %cst_20 [1] : vector<8x128xf32> to vector<8xf32>
    %36 = vector.shape_cast %35 : vector<8xf32> to vector<8x1xf32>
    %37 = vector.broadcast %36 : vector<8x1xf32> to vector<8x128xf32>
    %38 = arith.divf %34, %37 : vector<8x128xf32>
    %cst_21 = arith.constant 0.000000e+00 : f32
    %39 = vector.broadcast %cst_21 : f32 to vector<8x128xf32>
    %40 = arith.select %25, %38, %39 : vector<8x128xi1>, vector<8x128xf32>
    %41 = arith.truncf %40 : vector<8x128xf32> to vector<8x128xbf16>
    %c0_22 = arith.constant 0 : index
    %c0_23 = arith.constant 0 : index
    %42 = vector.load %arg8[%c0_22, %c0_23] : memref<8x128xbf16, #tpu.memory_space<vmem>>, vector<8x128xbf16>
    tpu.vector_store %arg8[%c0_22, %c0_23], %41 {strides = array<i32>} : memref<8x128xbf16, #tpu.memory_space<vmem>>, vector<8x128xbf16>,
    %43 = vector.extract_strided_slice %22 {offsets = [0, 4], sizes = [8, 1], strides = [1, 1]} : vector<8x128xf32> to vector<8x1xf32>
    %c0_24 = arith.constant 0 : index
    %c0_25 = arith.constant 0 : index
    %44 = vector.load %arg9[%c0_24, %c0_25] : memref<8x1xf32, #tpu.memory_space<vmem>>, vector<8x1xf32>
    tpu.vector_store %arg9[%c0_24, %c0_25], %43 {strides = array<i32>} : memref<8x1xf32, #tpu.memory_space<vmem>>, vector<8x1xf32>,
    return
  }
  func.func @transform_0(%arg0: i32) -> (i32, i32) {
    %c0_i32 = arith.constant 0 : i32
    %c0_i32_0 = arith.constant 0 : i32
    return %arg0, %c0_i32 : i32, i32
  }
  func.func @transform_1(%arg0: i32) -> (i32, i32) {
    %c0_i32 = arith.constant 0 : i32
    %c0_i32_0 = arith.constant 0 : i32
    %c0_i32_1 = arith.constant 0 : i32
    return %c0_i32, %c0_i32_0 : i32, i32
  }
  func.func @transform_2(%arg0: i32) -> (i32, i32) {
    %c0_i32 = arith.constant 0 : i32
    %c0_i32_0 = arith.constant 0 : i32
    %c0_i32_1 = arith.constant 0 : i32
    return %c0_i32, %c0_i32_0 : i32, i32
  }
  func.func @transform_3(%arg0: i32) -> (i32, i32) {
    %c0_i32 = arith.constant 0 : i32
    %c0_i32_0 = arith.constant 0 : i32
    %c0_i32_1 = arith.constant 0 : i32
    return %c0_i32, %c0_i32_0 : i32, i32
  }
  func.func @transform_4(%arg0: i32) -> (i32, i32) {
    %c0_i32 = arith.constant 0 : i32
    %c0_i32_0 = arith.constant 0 : i32
    %c0_i32_1 = arith.constant 0 : i32
    return %c0_i32, %c0_i32_0 : i32, i32
  }
  func.func @transform_5(%arg0: i32) -> (i32, i32) {
    %c0_i32 = arith.constant 0 : i32
    %c0_i32_0 = arith.constant 0 : i32
    %c0_i32_1 = arith.constant 0 : i32
    return %c0_i32, %c0_i32_0 : i32, i32
  }
  func.func @transform_6(%arg0: i32) -> (i32, i32) {
    %c0_i32 = arith.constant 0 : i32
    %c0_i32_0 = arith.constant 0 : i32
    %c0_i32_1 = arith.constant 0 : i32
    return %c0_i32, %c0_i32_0 : i32, i32
  }
  func.func @transform_7(%arg0: i32) -> (i32, i32) {
    %c0_i32 = arith.constant 0 : i32
    %c0_i32_0 = arith.constant 0 : i32
    return %arg0, %c0_i32 : i32, i32
  }
  func.func @transform_8(%arg0: i32) -> (i32, i32) {
    %c0_i32 = arith.constant 0 : i32
    %c0_i32_0 = arith.constant 0 : i32
    return %arg0, %c0_i32 : i32, i32
  }
}

</mosaic_0001>

<llo_original>
// kernel: tpu_custom_call.1
$region0: #{tpu_custom_call.1}
  #allocation0 [shape = 'u32[]', space=smem, size = 0x4, offset = 0x4, fixed_abs, tag = 'smem constant byte address 0x4 - core index']
  #allocation1 [shape = 'u32[72,128]{1,0:T(1,128)}', space=vmem, size = 0x9000, scoped, tag = 'internal scratch']
  %s0 = inlined_call_operand.hbm [shape: f32[8,16], index: 0, kind: input, shape index: {}]
  %s1 = inlined_call_operand.hbm [shape: bf16[16,32], index: 1, kind: input, shape index: {}]
  %s2 = inlined_call_operand.vmem [shape: f32[1,32], index: 2, kind: input, shape index: {}]
  %s3 = inlined_call_operand.hbm [shape: bf16[32,32], index: 3, kind: input, shape index: {}]
  %s4 = inlined_call_operand.vmem [shape: f32[1,32], index: 4, kind: input, shape index: {}]
  %s5 = inlined_call_operand.hbm [shape: bf16[32,128], index: 5, kind: input, shape index: {}]
  %s6 = inlined_call_operand.vmem [shape: f32[1,128], index: 6, kind: input, shape index: {}]
  %s7 = inlined_call_operand.hbm [shape: bf16[8,128], index: 7, kind: output, shape index: {0}]
  %s8 = inlined_call_operand.vmem [shape: f32[8,1], index: 8, kind: output, shape index: {1}]
  %9 = xla_tuple %s7, %s8
  %s10 = sld [smem:[#allocation0]]
  $region62: #{tpu_custom_call.1} parent=0
    _
  %s12 = ssub.s32 1, %s10
  %s13 = scalar_select 0, %s12, %s10
  $region1: #{tpu_custom_call.1} parent=0
    #allocation2 [shape = 'u8[4096]{0}', space=vmem, size = 0x1000, scoped, tag = 'input window, operand 0, single buffered']
    #allocation3 [shape = 's32[1]{0}', space=sflag, size = 0x4, scoped, tag = 'scoped memory for tpu_custom_call.1']
    #allocation4 [shape = 's32[1]{0}', space=sflag, size = 0x4, scoped, tag = 'scoped memory for tpu_custom_call.1']
    #allocation5 [shape = 'u8[4096]{0}', space=vmem, size = 0x1000, scoped, tag = 'input window, operand 1, single buffered']
    #allocation6 [shape = 's32[1]{0}', space=sflag, size = 0x4, scoped, tag = 'scoped memory for tpu_custom_call.1']
    #allocation7 [shape = 'u8[8192]{0}', space=vmem, size = 0x2000, scoped, tag = 'input window, operand 3, single buffered']
    #allocation8 [shape = 'u8[8192]{0}', space=vmem, size = 0x2000, scoped, tag = 'input window, operand 5, single buffered']
    #allocation9 [shape = 's32[1]{0}', space=sflag, size = 0x4, scoped, tag = 'scoped memory for tpu_custom_call.1']
    #allocation10 [shape = 'u8[2048]{0}', space=vmem, size = 0x800, scoped, tag = 'output window, operand 0, single buffered']
    %14 = vsyncpa [#allocation3], 0
    %15 = vsyncpa [#allocation6], 0
    %16 = vsyncpa [#allocation9], 0
    %17 = vsyncpa [#allocation4], 0
    // Predicated region
    $region2: #{tpu_custom_call.1} parent=1 // pred_check
      _
    $region3: #{tpu_custom_call.1} parent=1 // pred_check_branch
      %19 = sbr.rel (0) target = $region5
    $region4: #{tpu_custom_call.1} parent=1 // pred_region
      %21 = vsyncadd [#allocation3], 0
      %s23 = sshll.u32 %s0, 4
      %s24 = int_to_ptr.hbm [resolvable:$true] %s23
      %s25 = sshll.u32 [#allocation2], 4
      %s26 = int_to_ptr.vmem [resolvable:$true] %s25
      %28 = dma.hbm_to_vmem [thread:$0]  %s24, 128, %s26, [#allocation3]
    $region5: #{tpu_custom_call.1} parent=1 // pred_fallthru
      _
    // Predicated region
    $region6: #{tpu_custom_call.1} parent=1 // pred_check
      _
    $region7: #{tpu_custom_call.1} parent=1 // pred_check_branch
      %30 = sbr.rel (0) target = $region9
    $region8: #{tpu_custom_call.1} parent=1 // pred_region
      %32 = vsyncadd [#allocation6], 0
      %s33 = sshll.u32 %s1, 4
      %s34 = int_to_ptr.hbm [resolvable:$true] %s33
      %s35 = sshll.u32 [#allocation5], 4
      %s36 = int_to_ptr.vmem [resolvable:$true] %s35
      %41 = dma.hbm_to_vmem [thread:$0]  %s34, 128, %s36, [#allocation6], 64, 64, 4
    $region9: #{tpu_custom_call.1} parent=1 // pred_fallthru
      _
    // Predicated region
    $region10: #{tpu_custom_call.1} parent=1 // pred_check
      _
    $region11: #{tpu_custom_call.1} parent=1 // pred_check_branch
      %43 = sbr.rel (0) target = $region13
    $region12: #{tpu_custom_call.1} parent=1 // pred_region
      _
    $region13: #{tpu_custom_call.1} parent=1 // pred_fallthru
      _
    // Predicated region
    $region14: #{tpu_custom_call.1} parent=1 // pred_check
      _
    $region15: #{tpu_custom_call.1} parent=1 // pred_check_branch
      %45 = sbr.rel (0) target = $region17
    $region16: #{tpu_custom_call.1} parent=1 // pred_region
      %47 = vsyncadd [#allocation6], 0
      %s48 = sshll.u32 %s3, 4
      %s49 = int_to_ptr.hbm [resolvable:$true] %s48
      %s50 = sshll.u32 [#allocation7], 4
      %s51 = int_to_ptr.vmem [resolvable:$true] %s50
      %56 = dma.hbm_to_vmem [thread:$0]  %s49, 256, %s51, [#allocation6], 64, 64, 4
    $region17: #{tpu_custom_call.1} parent=1 // pred_fallthru
      _
    // Predicated region
    $region18: #{tpu_custom_call.1} parent=1 // pred_check
      _
    $region19: #{tpu_custom_call.1} parent=1 // pred_check_branch
      %58 = sbr.rel (0) target = $region21
    $region20: #{tpu_custom_call.1} parent=1 // pred_region
      _
    $region21: #{tpu_custom_call.1} parent=1 // pred_fallthru
      _
    // Predicated region
    $region22: #{tpu_custom_call.1} parent=1 // pred_check
      _
    $region23: #{tpu_custom_call.1} parent=1 // pred_check_branch
      %60 = sbr.rel (0) target = $region25
    $region24: #{tpu_custom_call.1} parent=1 // pred_region
      %62 = vsyncadd [#allocation9], 0
      %s63 = sshll.u32 %s5, 4
      %s64 = int_to_ptr.hbm [resolvable:$true] %s63
      %s65 = sshll.u32 [#allocation8], 4
      %s66 = int_to_ptr.vmem [resolvable:$true] %s65
      %71 = dma.hbm_to_vmem [thread:$0]  %s64, 256, %s66, [#allocation9], 64, 64, 4
    $region25: #{tpu_custom_call.1} parent=1 // pred_fallthru
      _
    // Predicated region
    $region26: #{tpu_custom_call.1} parent=1 // pred_check
      _
    $region27: #{tpu_custom_call.1} parent=1 // pred_check_branch
      %73 = sbr.rel (0) target = $region29
    $region28: #{tpu_custom_call.1} parent=1 // pred_region
      _
    $region29: #{tpu_custom_call.1} parent=1 // pred_fallthru
      _
    // Predicated region
    $region30: #{tpu_custom_call.1} parent=1 // pred_check
      _
    $region31: #{tpu_custom_call.1} parent=1 // pred_check_branch
      %75 = sbr.rel (0) target = $region33
    $region32: #{tpu_custom_call.1} parent=1 // pred_region
      %77 = dma.done [#allocation3], 128
    $region33: #{tpu_custom_call.1} parent=1 // pred_fallthru
      _
    // Predicated region
    $region34: #{tpu_custom_call.1} parent=1 // pred_check
      _
    $region35: #{tpu_custom_call.1} parent=1 // pred_check_branch
      %79 = sbr.rel (0) target = $region37
    $region36: #{tpu_custom_call.1} parent=1 // pred_region
      %81 = dma.done [#allocation6], 128
    $region37: #{tpu_custom_call.1} parent=1 // pred_fallthru
      _
    // Predicated region
    $region38: #{tpu_custom_call.1} parent=1 // pred_check
      _
    $region39: #{tpu_custom_call.1} parent=1 // pred_check_branch
      %83 = sbr.rel (0) target = $region41
    $region40: #{tpu_custom_call.1} parent=1 // pred_region
      %85 = dma.done [#allocation6], 256
    $region41: #{tpu_custom_call.1} parent=1 // pred_fallthru
      _
    // Predicated region
    $region42: #{tpu_custom_call.1} parent=1 // pred_check
      _
    $region43: #{tpu_custom_call.1} parent=1 // pred_check_branch
      %87 = sbr.rel (0) target = $region45
    $region44: #{tpu_custom_call.1} parent=1 // pred_region
      %89 = dma.done [#allocation9], 256
    $region45: #{tpu_custom_call.1} parent=1 // pred_fallthru
      _
    %v91 = vld [vmem:[#allocation2] sm:$0xff]
    %v92 = vpack.c.bf16 %v91, %v91
    %v93 = vld [vmem:[#allocation5] sm:$0xf]
    %v94 = vld [vmem:[#allocation5 + $0x4] sm:$0xf]
    %v95 = vld [vmem:[%s2] sm:$0x1]
    %v97 = vperm.slane %v95, 0
    %v101 = vunpack.c.l.b16 %v93
    %v102 = vunpack.c.l.b16 %v94
    %v103 = vpack.c.b16 %v102, %v101
    %vm105 = vcmask 130048
    %v107 = vsel %vm105, %v92, 0
    %109 = vmatpush.bf16.msra.mxu0 0
    %110 = vmatpush.bf16.msra.mxu0 0
    %111 = vmatpush.bf16.msra.mxu0 0
    %112 = vmatpush.bf16.msra.mxu0 0
    %113 = vmatpush.bf16.msra.mxu0 0
    %114 = vmatpush.bf16.msra.mxu0 0
    %115 = vmatpush.bf16.msra.mxu0 0
    %116 = vmatpush.bf16.msra.mxu0 %v103
    %117 = vmatmul.bf16.gmra.mxu0 %v107
    %v118 = vpop.f32.mrf.mxu0
    %v119 = vadd.f32 %v97, %v118
    %v120 = vpop.f32.mrf.mxu0
    %121 = vdwg.mxu0
    %v122 = vmax.f32 %v119, 0.0
    %v123 = vpack.c.bf16 %v122, %v122
    %v124 = vld [vmem:[#allocation7] sm:$0xf]
    %v125 = vld [vmem:[#allocation7 + $0x4] sm:$0xf]
    %v126 = vld [vmem:[#allocation7 + $0x8] sm:$0xf]
    %v127 = vld [vmem:[#allocation7 + $0xc] sm:$0xf]
    %v128 = vld [vmem:[%s4] sm:$0x1]
    %v130 = vperm.slane %v128, 0
    %v136 = vunpack.c.l.b16 %v124
    %v137 = vunpack.c.l.b16 %v125
    %v138 = vunpack.c.l.b16 %v126
    %v139 = vunpack.c.l.b16 %v127
    %v140 = vpack.c.b16 %v137, %v136
    %v141 = vpack.c.b16 %v139, %v138
    %vm144 = vcmask 261120
    %v146 = vsel %vm144, %v123, 0
    %148 = vmatpush.bf16.msra.mxu0 0
    %149 = vmatpush.bf16.msra.mxu0 0
    %150 = vmatpush.bf16.msra.mxu0 0
    %151 = vmatpush.bf16.msra.mxu0 0
    %152 = vmatpush.bf16.msra.mxu0 0
    %153 = vmatpush.bf16.msra.mxu0 0
    %154 = vmatpush.bf16.msra.mxu0 %v141
    %155 = vmatpush.bf16.msra.mxu0 %v140
    %156 = vmatmul.bf16.gmra.mxu0 %v146
    %v157 = vpop.f32.mrf.mxu0
    %v158 = vadd.f32 %v130, %v157
    %v159 = vpop.f32.mrf.mxu0
    %160 = vdwg.mxu0
    %v161 = vmax.f32 %v158, 0.0
    %v162 = vpack.c.bf16 %v161, %v161
    %v163 = vld [vmem:[#allocation8] sm:$0xf]
    %v164 = vld [vmem:[#allocation8 + $0x4] sm:$0xf]
    %v165 = vld [vmem:[#allocation8 + $0x8] sm:$0xf]
    %v166 = vld [vmem:[#allocation8 + $0xc] sm:$0xf]
    %v167 = vld [vmem:[%s6] sm:$0x1]
    %v169 = vperm.slane %v167, 0
    %v175 = vunpack.c.l.b16 %v163
    %v176 = vunpack.c.l.b16 %v164
    %v177 = vunpack.c.l.b16 %v165
    %v178 = vunpack.c.l.b16 %v166
    %v179 = vpack.c.b16 %v176, %v175
    %v180 = vpack.c.b16 %v178, %v177
    %v184 = vsel %vm144, %v162, 0
    %186 = vmatpush.bf16.msra.mxu0 0
    %187 = vmatpush.bf16.msra.mxu0 0
    %188 = vmatpush.bf16.msra.mxu0 0
    %189 = vmatpush.bf16.msra.mxu0 0
    %190 = vmatpush.bf16.msra.mxu0 0
    %191 = vmatpush.bf16.msra.mxu0 0
    %192 = vmatpush.bf16.msra.mxu0 %v180
    %193 = vmatpush.bf16.msra.mxu0 %v179
    %194 = vmatmul.bf16.gmra.mxu0 %v184
    %v195 = vpop.f32.mrf.mxu0
    %v196 = vadd.f32 %v169, %v195
    %v197 = vpop.f32.mrf.mxu0
    %198 = vdwg.mxu0
    %v199 = vlaneseq
    %v200 = vand.u32 %v199, 127
    %vm201 = vcmp.lt.s32.totalorder %v200, 4
    %v202 = vsel %vm201, %v196, -inf
    %203 = vmax.xlane.f32.xlu0 %v202
    %v204 = vpop.xlane.xlu0 %203
    %v205 = vsub.f32 %v196, %v204
    %v206 = vmul.f32 %v205, 1.442695
    %v207 = vpow.pop %v206
    %v208 = vsel %vm201, %v207, 0.0
    %209 = vadd.xlane.f32.xlu0 %v208
    %v210 = vpop.xlane.xlu0 %209
    %v211 = vrcp.pop %v210
    %v212 = vmul.f32 %v210, %v211
    %v213 = vsub.f32 1.0, %v212
    %v214 = vmul.f32 %v211, %v213
    %v215 = vadd.f32 %v211, %v214
    %vm216 = vweird.f32 %v210
    %vm217 = vweird.f32 %v211
    %vm218 = vmor %vm216, %vm217
    %v219 = vsel %vm218, %v211, %v215
    %v220 = vand.u32 2147483647, %v210
    %vm221 = vcmp.eq.f32.partialorder %v220, 8.507059e+37
    %v222 = vand.u32 %v210, 2147483648
    %v223 = vor.u32 1.1754944e-38, %v222
    %v224 = vsel %vm221, %v223, %v219
    %v225 = vmul.f32 %v208, %v224
    %v226 = vsel %vm201, %v225, 0.0
    %v227 = vpack.c.bf16 %v226, %v226
    %228 = vst [vmem:[#allocation10] sm:$0xf] %v227
    %230 = vrot.lane.b32.xlu0 %v196, 124
    %v231 = vpop.permute.xlu0 %230
    %vm233 = vcmask 7168
    %234 = vst.msk [vmem:[%s8] sm:$0xff] %vm233, %v231
    // Predicated region
    $region46: #{tpu_custom_call.1} parent=1 // pred_check
      _
    $region47: #{tpu_custom_call.1} parent=1 // pred_check_branch
      %236 = sbr.rel (0) target = $region49
    $region48: #{tpu_custom_call.1} parent=1 // pred_region
      %238 = vsyncadd [#allocation4], 0
      %s240 = sshll.u32 [#allocation10], 4
      %s241 = int_to_ptr.vmem [resolvable:$true] %s240
      %s242 = sshll.u32 %s7, 4
      %s243 = int_to_ptr.hbm [resolvable:$true] %s242
      %245 = dma.vmem_to_hbm [thread:$0]  %s241, 64, %s243, [#allocation4]
    $region49: #{tpu_custom_call.1} parent=1 // pred_fallthru
      _
    // Predicated region
    $region50: #{tpu_custom_call.1} parent=1 // pred_check
      _
    $region51: #{tpu_custom_call.1} parent=1 // pred_check_branch
      %247 = sbr.rel (0) target = $region53
    $region52: #{tpu_custom_call.1} parent=1 // pred_region
      _
    $region53: #{tpu_custom_call.1} parent=1 // pred_fallthru
      _
    // Predicated region
    $region54: #{tpu_custom_call.1} parent=1 // pred_check
      _
    $region55: #{tpu_custom_call.1} parent=1 // pred_check_branch
      %249 = sbr.rel (0) target = $region57
    $region56: #{tpu_custom_call.1} parent=1 // pred_region
      %251 = dma.done [#allocation4], 64
    $region57: #{tpu_custom_call.1} parent=1 // pred_fallthru
      _
    // Predicated region
    $region58: #{tpu_custom_call.1} parent=1 // pred_check
      _
    $region59: #{tpu_custom_call.1} parent=1 // pred_check_branch
      %253 = sbr.rel (0) target = $region61
    $region60: #{tpu_custom_call.1} parent=1 // pred_region
      _
    $region61: #{tpu_custom_call.1} parent=1 // pred_fallthru
      _
    %254 = vsyncpa [#allocation3], 1
    %255 = vsyncpa [#allocation6], 1
    %256 = vsyncpa [#allocation9], 1
    %257 = vsyncpa [#allocation4], 1

</llo_original>
